<compile_context>
chip_gen: v5e
topology: v5e:2x2
jax: 0.10.0
libtpu: 0.0.40
codegen_flags: <defaults>
</compile_context>

<pallas_src>
import jax
import jax.numpy as jnp
from jax.experimental import pallas as pl
from jax.experimental.pallas import tpu as pltpu

_SUBLANE = 8


def _round_up(n: int, m: int) -> int:
    return ((n + m - 1) // m) * m


def _choose_tile_b(batch: int, target: int) -> int:
    """Balanced batch tiles: waste bounded by sublane rounding per tile, and
    >=2 grid steps once the batch is big enough to split across v7x's 2 TCs."""
    n_tiles = max(pl.cdiv(batch, target), 2 if batch >= 256 else 1)
    tile_b = _round_up(pl.cdiv(batch, n_tiles), _SUBLANE)
    return min(tile_b, _round_up(batch, _SUBLANE))


def init_decoder_params(weight: jax.Array, bias: jax.Array,
                        *, param_dtype=jnp.float32):
    """One-time parameter prep (do NOT repeat per forward call).

    * weight (out_dim, in_dim) [PyTorch layout] -> K-major (in_dim, out_dim) so
      the grid-resident MXU operand needs no per-step transpose.
    * bias -> (1, out_dim) for a TPU-friendly 2-D layout.
    * param_dtype=jnp.bfloat16 is an optional win on v6e/v7x (native MXU path,
      half the weight DMA/VMEM); keep float32 for exact 1e-5 parity / v5e.
    """
    w_t = jnp.asarray(weight).T.astype(param_dtype)
    b2d = jnp.asarray(bias).reshape(1, -1).astype(jnp.float32)
    return w_t, b2d


def _decoder_kernel(x_ref, w_ref, b_ref, o_ref):
    # SiLU (swish) in f32 on the VPU (sigmoid on the EUP); v5e has no bf16
    # elementwise path, so activation math stays f32 on all generations.
    x = x_ref[...]
    act = x * jax.nn.sigmoid(x)
    # MXU matmul with f32 accumulation. The weight is already K-major, so no
    # transpose is materialized; the cast is a no-op for f32 params and gives
    # the native bf16 MXU path when params were stored as bf16 at init.
    y = jnp.dot(act.astype(w_ref.dtype), w_ref[...],
                preferred_element_type=jnp.float32)
    o_ref[...] = (y + b_ref[...]).astype(o_ref.dtype)


def decoder_forward(x: jax.Array, w_t: jax.Array, bias2d: jax.Array,
                    *, tile_b_target: int = 1024,
                    force_pallas: bool = False) -> jax.Array:
    """x: (B, 2H); w_t: (2H, out_dim) from init_decoder_params; bias2d: (1, out_dim)."""
    batch, in_dim = x.shape
    k_dim, out_dim = w_t.shape
    assert k_dim == in_dim and bias2d.shape == (1, out_dim)

    # Tiny problems: a fused XLA silu+matmul beats the custom-call launch cost.
    if not force_pallas and batch * in_dim * out_dim < (1 << 20):
        act = x * jax.nn.sigmoid(x)
        y = jnp.dot(act.astype(w_t.dtype), w_t,
                    preferred_element_type=jnp.float32)
        return (y + bias2d).astype(x.dtype)

    tile_b = _choose_tile_b(batch, tile_b_target)
    grid = (pl.cdiv(batch, tile_b),)

    itemsize = x.dtype.itemsize
    cost = pl.CostEstimate(
        flops=2 * batch * in_dim * out_dim + 4 * batch * in_dim,
        transcendentals=batch * in_dim,
        bytes_accessed=(batch * in_dim * itemsize
                        + in_dim * out_dim * w_t.dtype.itemsize
                        + out_dim * 4
                        + batch * out_dim * itemsize),
    )

    return pl.pallas_call(
        _decoder_kernel,
        out_shape=jax.ShapeDtypeStruct((batch, out_dim), x.dtype),
        grid_spec=pl.GridSpec(
            grid=grid,
            in_specs=[
                # x: streamed per batch tile; last dim equals the true in_dim,
                # so no per-call padding / no extra HBM traffic.
                pl.BlockSpec((tile_b, in_dim), lambda i: (i, 0)),
                # weight: VMEM-resident across the whole grid; constant
                # index_map needs no double buffer -> Buffered(1) halves VMEM.
                pl.BlockSpec((in_dim, out_dim), lambda i: (0, 0),
                             pipeline_mode=pl.Buffered(1)),
                # bias: resident, 2-D.
                pl.BlockSpec((1, out_dim), lambda i: (0, 0),
                             pipeline_mode=pl.Buffered(1)),
            ],
            # NOTE: if out_dim is not a 128-multiple the stores are lane-masked;
            # that is still far cheaper than padding the output and paying an
            # extra HBM read+write slice pass afterwards. Consumers that accept
            # a padded result can instead pad weight/bias out_dim at init.
            out_specs=pl.BlockSpec((tile_b, out_dim), lambda i: (i, 0)),
        ),
        compiler_params=pltpu.CompilerParams(
            # Batch tiles are independent -> shard across v7x's 2 TensorCores.
            dimension_semantics=("parallel",),
        ),
        cost_estimate=cost,
    )(x, w_t, bias2d)


def reference_forward(x, weight, bias):
    act = x * jax.nn.sigmoid(x)
    return act @ weight.T + bias


if __name__ == "__main__":
    # Small shapes consistent with the module: hidden_dim=16 -> in_dim=32.
    batch = 8
    hidden_dim = 16
    output_dim = 32
    in_dim = hidden_dim * 2

    key = jax.random.PRNGKey(0)
    kx, kw, kb = jax.random.split(key, 3)

    x = jax.random.normal(kx, (batch, in_dim), dtype=jnp.float32)
    # Deterministic nn.Linear-style init (uniform in +-1/sqrt(in_dim)).
    bound = 1.0 / jnp.sqrt(jnp.float32(in_dim))
    weight = jax.random.uniform(kw, (output_dim, in_dim), jnp.float32, -bound, bound)
    bias = jax.random.uniform(kb, (output_dim,), jnp.float32, -bound, bound)

    # One-time parameter prep (pre-transposed, TPU-friendly layout).
    w_t, b2d = init_decoder_params(weight, bias)

    # Force the Pallas path at this tiny demo size (the wrapper would otherwise
    # take the fused-XLA fallback, which is faster for such small problems).
    out = decoder_forward(x, w_t, b2d, force_pallas=True)
    out = jax.block_until_ready(out)
    ref = reference_forward(x, weight, bias)
    assert out.shape == (batch, output_dim)
    assert jnp.allclose(out, ref, atol=1e-5, rtol=1e-5), "mismatch vs reference"

    # Also exercise a multi-tile grid with a partial trailing batch tile
    # (masked boundary reads/writes, 2 "parallel" grid steps).
    b2 = 260
    x2 = jax.random.normal(kx, (b2, in_dim), dtype=jnp.float32)
    out2 = jax.block_until_ready(decoder_forward(x2, w_t, b2d, force_pallas=True))
    ref2 = reference_forward(x2, weight, bias)
    assert out2.shape == (b2, output_dim)
    assert jnp.allclose(out2, ref2, atol=1e-5, rtol=1e-5), "mismatch vs reference (tiled)"

    print("KERNEL_OK")
</pallas_src>

<mosaic_0001>
module attributes {stable_mosaic.version = 11 : i64} {
  func.func @_decoder_kernel(%arg0: i32, %arg1: memref<8x32xf32, #tpu.memory_space<vmem>>, %arg2: memref<32x32xf32, #tpu.memory_space<vmem>>, %arg3: memref<1x32xf32, #tpu.memory_space<vmem>>, %arg4: memref<8x32xf32, #tpu.memory_space<vmem>>) attributes {dimension_semantics = [#tpu.dimension_semantics<parallel>], iteration_bounds = array<i64: 1>, scalar_prefetch = 0 : i64, scratch_operands = 0 : i64, tpu.core_type = #tpu.core_type<tc>, window_params = [{transform_indices = @transform_0, window_bounds = array<i64: 8, 32>}, {pipeline_mode = #tpu.pipeline_mode<synchronous>, transform_indices = @transform_1, window_bounds = array<i64: 32, 32>}, {pipeline_mode = #tpu.pipeline_mode<synchronous>, transform_indices = @transform_2, window_bounds = array<i64: 1, 32>}, {transform_indices = @transform_3, window_bounds = array<i64: 8, 32>}]} {
    %c0 = arith.constant 0 : index
    %c0_0 = arith.constant 0 : index
    %0 = vector.load %arg1[%c0, %c0_0] : memref<8x32xf32, #tpu.memory_space<vmem>>, vector<8x32xf32>
    %1 = arith.negf %0 : vector<8x32xf32>
    %2 = math.exp %1 : vector<8x32xf32>
    %cst = arith.constant 1.000000e+00 : f32
    %3 = vector.broadcast %cst : f32 to vector<8x32xf32>
    %4 = arith.addf %3, %2 : vector<8x32xf32>
    %5 = arith.divf %3, %4 : vector<8x32xf32>
    %6 = arith.mulf %0, %5 : vector<8x32xf32>
    %c0_1 = arith.constant 0 : index
    %c0_2 = arith.constant 0 : index
    %7 = vector.load %arg2[%c0_1, %c0_2] : memref<32x32xf32, #tpu.memory_space<vmem>>, vector<32x32xf32>
    %cst_3 = arith.constant dense<0.000000e+00> : vector<8x32xf32>
    %8 = tpu.matmul %6, %7, %cst_3 {dimension_numbers = #tpu.dot_dimension_numbers<[1], [0], [0], [1], [0, 0, 1, 1], [], []>} : vector<8x32xf32>, vector<32x32xf32>, vector<8x32xf32> -> vector<8x32xf32>
    %c0_4 = arith.constant 0 : index
    %c0_5 = arith.constant 0 : index
    %9 = vector.load %arg3[%c0_4, %c0_5] : memref<1x32xf32, #tpu.memory_space<vmem>>, vector<1x32xf32>
    %10 = vector.broadcast %9 : vector<1x32xf32> to vector<8x32xf32>
    %11 = arith.addf %8, %10 : vector<8x32xf32>
    %c0_6 = arith.constant 0 : index
    %c0_7 = arith.constant 0 : index
    %12 = vector.load %arg4[%c0_6, %c0_7] : memref<8x32xf32, #tpu.memory_space<vmem>>, vector<8x32xf32>
    tpu.vector_store %arg4[%c0_6, %c0_7], %11 {strides = array<i32>} : memref<8x32xf32, #tpu.memory_space<vmem>>, vector<8x32xf32>,
    return
  }
  func.func @transform_0(%arg0: i32) -> (i32, i32) {
    %c0_i32 = arith.constant 0 : i32
    %c0_i32_0 = arith.constant 0 : i32
    return %arg0, %c0_i32 : i32, i32
  }
  func.func @transform_1(%arg0: i32) -> (i32, i32) {
    %c0_i32 = arith.constant 0 : i32
    %c0_i32_0 = arith.constant 0 : i32
    %c0_i32_1 = arith.constant 0 : i32
    return %c0_i32, %c0_i32_0 : i32, i32
  }
  func.func @transform_2(%arg0: i32) -> (i32, i32) {
    %c0_i32 = arith.constant 0 : i32
    %c0_i32_0 = arith.constant 0 : i32
    %c0_i32_1 = arith.constant 0 : i32
    return %c0_i32, %c0_i32_0 : i32, i32
  }
  func.func @transform_3(%arg0: i32) -> (i32, i32) {
    %c0_i32 = arith.constant 0 : i32
    %c0_i32_0 = arith.constant 0 : i32
    return %arg0, %c0_i32 : i32, i32
  }
}

</mosaic_0001>

<llo_original>
// kernel: tpu_custom_call.1
$region0: #{tpu_custom_call.1}
  #allocation0 [shape = 'u32[]', space=smem, size = 0x4, offset = 0x4, fixed_abs, tag = 'smem constant byte address 0x4 - core index']
  #allocation1 [shape = 'u32[72,128]{1,0:T(1,128)}', space=vmem, size = 0x9000, scoped, tag = 'internal scratch']
  %s0 = inlined_call_operand.hbm [shape: f32[8,32], index: 0, kind: input, shape index: {}]
  %s1 = inlined_call_operand.hbm [shape: f32[32,32], index: 1, kind: input, shape index: {}]
  %s2 = inlined_call_operand.vmem [shape: f32[1,32], index: 2, kind: input, shape index: {}]
  %s3 = inlined_call_operand.hbm [shape: f32[8,32], index: 3, kind: output, shape index: {}]
  %s4 = sld [smem:[#allocation0]]
  $region30: #{tpu_custom_call.1} parent=0
    _
  %s6 = ssub.s32 1, %s4
  %s7 = scalar_select 0, %s6, %s4
  $region1: #{tpu_custom_call.1} parent=0
    #allocation2 [shape = 'u8[4096]{0}', space=vmem, size = 0x1000, scoped, tag = 'input window, operand 0, single buffered']
    #allocation3 [shape = 's32[1]{0}', space=sflag, size = 0x4, scoped, tag = 'scoped memory for tpu_custom_call.1']
    #allocation4 [shape = 's32[1]{0}', space=sflag, size = 0x4, scoped, tag = 'scoped memory for tpu_custom_call.1']
    #allocation5 [shape = 'u8[16384]{0}', space=vmem, size = 0x4000, scoped, tag = 'input window, operand 1, single buffered']
    #allocation6 [shape = 's32[1]{0}', space=sflag, size = 0x4, scoped, tag = 'scoped memory for tpu_custom_call.1']
    #allocation7 [shape = 'u8[4096]{0}', space=vmem, size = 0x1000, scoped, tag = 'output window, operand 0, single buffered']
    %8 = vsyncpa [#allocation3], 0
    %9 = vsyncpa [#allocation6], 0
    %10 = vsyncpa [#allocation4], 0
    // Predicated region
    $region2: #{tpu_custom_call.1} parent=1 // pred_check
      _
    $region3: #{tpu_custom_call.1} parent=1 // pred_check_branch
      %12 = sbr.rel (0) target = $region5
    $region4: #{tpu_custom_call.1} parent=1 // pred_region
      %14 = vsyncadd [#allocation3], 0
      %s16 = sshll.u32 %s0, 4
      %s17 = int_to_ptr.hbm [resolvable:$true] %s16
      %s18 = sshll.u32 [#allocation2], 4
      %s19 = int_to_ptr.vmem [resolvable:$true] %s18
      %21 = dma.hbm_to_vmem [thread:$0]  %s17, 128, %s19, [#allocation3]
    $region5: #{tpu_custom_call.1} parent=1 // pred_fallthru
      _
    // Predicated region
    $region6: #{tpu_custom_call.1} parent=1 // pred_check
      _
    $region7: #{tpu_custom_call.1} parent=1 // pred_check_branch
      %23 = sbr.rel (0) target = $region9
    $region8: #{tpu_custom_call.1} parent=1 // pred_region
      %25 = vsyncadd [#allocation6], 0
      %s26 = sshll.u32 %s1, 4
      %s27 = int_to_ptr.hbm [resolvable:$true] %s26
      %s28 = sshll.u32 [#allocation5], 4
      %s29 = int_to_ptr.vmem [resolvable:$true] %s28
      %34 = dma.hbm_to_vmem [thread:$0]  %s27, 512, %s29, [#allocation6], 128, 128, 8
    $region9: #{tpu_custom_call.1} parent=1 // pred_fallthru
      _
    // Predicated region
    $region10: #{tpu_custom_call.1} parent=1 // pred_check
      _
    $region11: #{tpu_custom_call.1} parent=1 // pred_check_branch
      %36 = sbr.rel (0) target = $region13
    $region12: #{tpu_custom_call.1} parent=1 // pred_region
      _
    $region13: #{tpu_custom_call.1} parent=1 // pred_fallthru
      _
    // Predicated region
    $region14: #{tpu_custom_call.1} parent=1 // pred_check
      _
    $region15: #{tpu_custom_call.1} parent=1 // pred_check_branch
      %38 = sbr.rel (0) target = $region17
    $region16: #{tpu_custom_call.1} parent=1 // pred_region
      %40 = dma.done [#allocation3], 128
    $region17: #{tpu_custom_call.1} parent=1 // pred_fallthru
      _
    // Predicated region
    $region18: #{tpu_custom_call.1} parent=1 // pred_check
      _
    $region19: #{tpu_custom_call.1} parent=1 // pred_check_branch
      %42 = sbr.rel (0) target = $region21
    $region20: #{tpu_custom_call.1} parent=1 // pred_region
      %44 = dma.done [#allocation6], 512
    $region21: #{tpu_custom_call.1} parent=1 // pred_fallthru
      _
    %v45 = vld [vmem:[#allocation2] sm:$0xff]
    %v46 = vxor.u32 %v45, 2147483648
    %v47 = vmul.f32 %v46, 1.442695
    %v48 = vpow.pop %v47
    %v49 = vadd.f32 %v48, 1.0
    %v50 = vrcp.pop %v49
    %v51 = vmul.f32 %v49, %v50
    %v52 = vsub.f32 1.0, %v51
    %v53 = vmul.f32 %v50, %v52
    %v54 = vadd.f32 %v50, %v53
    %vm55 = vweird.f32 %v49
    %vm56 = vweird.f32 %v50
    %vm57 = vmor %vm55, %vm56
    %v58 = vsel %vm57, %v50, %v54
    %v59 = vand.u32 2147483647, %v49
    %vm60 = vcmp.eq.f32.partialorder %v59, 8.507059e+37
    %v61 = vand.u32 %v49, 2147483648
    %v62 = vor.u32 1.1754944e-38, %v61
    %v63 = vsel %vm60, %v62, %v58
    %v64 = vmul.f32 1.0, %v63
    %v65 = vmul.f32 %v45, %v64
    %v66 = vld [vmem:[#allocation5] sm:$0xff]
    %v67 = vld [vmem:[#allocation5 + $0x8] sm:$0xff]
    %v68 = vld [vmem:[#allocation5 + $0x10] sm:$0xff]
    %v69 = vld [vmem:[#allocation5 + $0x18] sm:$0xff]
    %v70 = vld [vmem:[%s2] sm:$0x1]
    %v72 = vperm.slane %v70, 0
    %vm74 = vcmask 261120
    %v76 = vsel %vm74, %v65, 0
    %78 = vmatpush.msra.mxu0 0.0
    %79 = vmatpush.msra.mxu0 0.0
    %80 = vmatpush.msra.mxu0 0.0
    %81 = vmatpush.msra.mxu0 0.0
    %82 = vmatpush.msra.mxu0 0.0
    %83 = vmatpush.msra.mxu0 0.0
    %84 = vmatpush.msra.mxu0 0.0
    %85 = vmatpush.msra.mxu0 0.0
    %86 = vmatpush.msra.mxu0 0.0
    %87 = vmatpush.msra.mxu0 0.0
    %88 = vmatpush.msra.mxu0 0.0
    %89 = vmatpush.msra.mxu0 0.0
    %90 = vmatpush.msra.mxu0 %v69
    %91 = vmatpush.msra.mxu0 %v68
    %92 = vmatpush.msra.mxu0 %v67
    %93 = vmatpush.msra.mxu0 %v66
    %94 = vmatmul.f32.gmra.mxu0 %v76
    %v95 = vpop.f32.mrf.mxu0
    %v96 = vadd.f32 %v72, %v95
    %97 = vdwg.mxu0
    %98 = vst.msk [vmem:[#allocation7] sm:$0xff] %vm74, %v96
    // Predicated region
    $region22: #{tpu_custom_call.1} parent=1 // pred_check
      _
    $region23: #{tpu_custom_call.1} parent=1 // pred_check_branch
      %100 = sbr.rel (0) target = $region25
    $region24: #{tpu_custom_call.1} parent=1 // pred_region
      %102 = vsyncadd [#allocation4], 0
      %s104 = sshll.u32 [#allocation7], 4
      %s105 = int_to_ptr.vmem [resolvable:$true] %s104
      %s106 = sshll.u32 %s3, 4
      %s107 = int_to_ptr.hbm [resolvable:$true] %s106
      %109 = dma.vmem_to_hbm [thread:$0]  %s105, 128, %s107, [#allocation4]
    $region25: #{tpu_custom_call.1} parent=1 // pred_fallthru
      _
    // Predicated region
    $region26: #{tpu_custom_call.1} parent=1 // pred_check
      _
    $region27: #{tpu_custom_call.1} parent=1 // pred_check_branch
      %111 = sbr.rel (0) target = $region29
    $region28: #{tpu_custom_call.1} parent=1 // pred_region
      %113 = dma.done [#allocation4], 128
    $region29: #{tpu_custom_call.1} parent=1 // pred_fallthru
      _
    %114 = vsyncpa [#allocation3], 1
    %115 = vsyncpa [#allocation6], 1
    %116 = vsyncpa [#allocation4], 1

</llo_original>
